<compile_context>
chip_gen: v6e
topology: v6e:2x2x1
jax: 0.10.0
libtpu: 0.0.40
codegen_flags: <defaults>
</compile_context>

<pallas_src>
import functools

import jax
import jax.numpy as jnp
from jax.experimental import pallas as pl
from jax.experimental.pallas import tpu as pltpu

D_OUT = 128  # hard-coded split point in the PyTorch forward (text_[:, :128] / [:, 128:])


def condition_agu_kernel(x_ref, w_ref, b_ref, noise_ref, out_ref):
    # Linear layer on the MXU: (TB, D_in) bf16 @ (D_in, 2*D_out) bf16 -> f32 acc.
    # Single fused 256-wide dot (do NOT split per mean/logvar — one wide MXU push).
    y = jnp.dot(x_ref[...], w_ref[...], preferred_element_type=jnp.float32)
    y = y + b_ref[...]                      # (1, 2*D_out) f32 bias broadcasts over rows

    mean = y[:, :D_OUT]
    logvar = y[:, D_OUT:]
    stdev = jnp.exp(logvar * 0.5)           # EUP transcendental, f32
    ca = mean + stdev * noise_ref[...]      # reparameterization trick, f32 VPU

    # Single lane-dense (TB, 3*128) output slab: [mean | logvar | ca].
    out_ref[:, :D_OUT] = mean.astype(out_ref.dtype)
    out_ref[:, D_OUT:2 * D_OUT] = logvar.astype(out_ref.dtype)
    out_ref[:, 2 * D_OUT:] = ca.astype(out_ref.dtype)


def _round_up(x, m):
    return ((x + m - 1) // m) * m


@functools.partial(jax.jit, static_argnames=("tb",))
def condition_agu(x, w, b, noise, *, tb=None):
    """x: (B, D_in), w: (D_in, 2*D_out), b: (2*D_out,), noise: (B, D_out).

    Returns (mean, logvar, ca), each (B, D_out) float32.
    """
    B, D_in = x.shape
    two_dout = w.shape[1]
    assert two_dout == 2 * D_OUT
    assert noise.shape == (B, D_OUT)

    # bf16 matmul inputs: the weight DMA dominates bytes moved; bf16 halves it and
    # feeds the MXU its native input dtype.  Accumulation stays f32 in the kernel.
    x_bf = x.astype(jnp.bfloat16)
    w_bf = w.astype(jnp.bfloat16)
    b2d = b.reshape(1, two_dout).astype(jnp.float32)   # glue: 2-D f32 bias
    noise_f32 = noise.astype(jnp.float32)

    # Batch tile: multiple of 8 sublanes; capped so resident bf16 weight + double-
    # buffered x/noise/out tiles stay far under the v7x VMEM budget (64 MiB phys /
    # 32 MiB scoped default).
    if tb is None:
        tb = min(512, _round_up(B, 8))
    Bp = _round_up(B, tb)
    if Bp != B:
        pad = Bp - B
        x_bf = jnp.pad(x_bf, ((0, pad), (0, 0)))
        noise_f32 = jnp.pad(noise_f32, ((0, pad), (0, 0)))

    grid = (Bp // tb,)

    cost = pl.CostEstimate(
        flops=2 * Bp * D_in * two_dout,
        transcendentals=Bp * D_OUT,
        bytes_accessed=(x_bf.size * 2 + w_bf.size * 2 + b2d.size * 4
                        + noise_f32.size * 4 + Bp * 3 * D_OUT * 4),
    )

    out = pl.pallas_call(
        condition_agu_kernel,
        out_shape=jax.ShapeDtypeStruct((Bp, 3 * D_OUT), jnp.float32),
        grid_spec=pltpu.PrefetchScalarGridSpec(
            num_scalar_prefetch=0,
            grid=grid,
            in_specs=[
                pl.BlockSpec((tb, D_in), lambda i: (i, 0)),        # x: streams over B
                pl.BlockSpec((D_in, two_dout), lambda i: (0, 0)),  # w: resident in VMEM
                pl.BlockSpec((1, two_dout), lambda i: (0, 0)),     # b: resident in VMEM
                pl.BlockSpec((tb, D_OUT), lambda i: (i, 0)),       # noise: streams over B
            ],
            out_specs=pl.BlockSpec((tb, 3 * D_OUT), lambda i: (i, 0)),
        ),
        compiler_params=pltpu.CompilerParams(
            dimension_semantics=("parallel",),   # v7x: shard B tiles across both TCs
        ),
        cost_estimate=cost,
    )(x_bf, w_bf, b2d, noise_f32)

    out = out[:B]
    mean = out[:, :D_OUT]
    logvar = out[:, D_OUT:2 * D_OUT]
    ca = out[:, 2 * D_OUT:]
    return mean, logvar, ca


if __name__ == "__main__":
    B = 8          # batch
    D_IN = 256     # input_shape
    # output_shape == 128 is forced by the hard-coded slice in the PyTorch forward.

    key = jax.random.PRNGKey(0)
    kx, kw, kb, kn = jax.random.split(key, 4)

    x = jax.random.normal(kx, (B, D_IN), dtype=jnp.float32)
    # Deterministic "Linear" parameters (synthetic init, not a checkpoint load).
    w = jax.random.normal(kw, (D_IN, 2 * D_OUT), dtype=jnp.float32) * 0.02
    b = jax.random.normal(kb, (2 * D_OUT,), dtype=jnp.float32) * 0.01
    # torch.normal(0, 1, size=stdev.size()) -> deterministic standard-normal noise here.
    noise = jax.random.normal(kn, (B, D_OUT), dtype=jnp.float32)

    mean, logvar, ca = condition_agu(x, w, b, noise)
    jax.block_until_ready((mean, logvar, ca))

    # Correctness check 1: against reference using the same bf16-rounded matmul inputs
    # (isolates kernel correctness from the deliberate bf16 quantization).
    y_bf_ref = (x.astype(jnp.bfloat16).astype(jnp.float32)
                @ w.astype(jnp.bfloat16).astype(jnp.float32)) + b
    mean_bf = y_bf_ref[:, :D_OUT]
    logvar_bf = y_bf_ref[:, D_OUT:]
    ca_bf = mean_bf + jnp.exp(logvar_bf * 0.5) * noise
    assert jnp.allclose(mean, mean_bf, atol=1e-4, rtol=1e-4)
    assert jnp.allclose(logvar, logvar_bf, atol=1e-4, rtol=1e-4)
    assert jnp.allclose(ca, ca_bf, atol=1e-4, rtol=1e-4)

    # Correctness check 2: against the full-f32 reference with bf16-appropriate tolerance.
    y_ref = x @ w + b
    mean_ref = y_ref[:, :D_OUT]
    logvar_ref = y_ref[:, D_OUT:]
    ca_ref = mean_ref + jnp.exp(logvar_ref * 0.5) * noise
    assert jnp.allclose(mean, mean_ref, atol=2e-2, rtol=2e-2)
    assert jnp.allclose(logvar, logvar_ref, atol=2e-2, rtol=2e-2)
    assert jnp.allclose(ca, ca_ref, atol=2e-2, rtol=2e-2)

    print("KERNEL_OK")
</pallas_src>

<mosaic_0001>
module attributes {stable_mosaic.version = 11 : i64} {
  func.func @condition_agu_kernel(%arg0: i32, %arg1: memref<8x256xbf16, #tpu.memory_space<vmem>>, %arg2: memref<256x256xbf16, #tpu.memory_space<vmem>>, %arg3: memref<1x256xf32, #tpu.memory_space<vmem>>, %arg4: memref<8x128xf32, #tpu.memory_space<vmem>>, %arg5: memref<8x384xf32, #tpu.memory_space<vmem>>) attributes {dimension_semantics = [#tpu.dimension_semantics<parallel>], iteration_bounds = array<i64: 1>, scalar_prefetch = 0 : i64, scratch_operands = 0 : i64, tpu.core_type = #tpu.core_type<tc>, window_params = [{transform_indices = @transform_0, window_bounds = array<i64: 8, 256>}, {pipeline_mode = #tpu.pipeline_mode<synchronous>, transform_indices = @transform_1, window_bounds = array<i64: 256, 256>}, {pipeline_mode = #tpu.pipeline_mode<synchronous>, transform_indices = @transform_2, window_bounds = array<i64: 1, 256>}, {transform_indices = @transform_3, window_bounds = array<i64: 8, 128>}, {transform_indices = @transform_4, window_bounds = array<i64: 8, 384>}]} {
    %c0 = arith.constant 0 : index
    %c0_0 = arith.constant 0 : index
    %0 = vector.load %arg1[%c0, %c0_0] : memref<8x256xbf16, #tpu.memory_space<vmem>>, vector<8x256xbf16>
    %c0_1 = arith.constant 0 : index
    %c0_2 = arith.constant 0 : index
    %1 = vector.load %arg2[%c0_1, %c0_2] : memref<256x256xbf16, #tpu.memory_space<vmem>>, vector<256x256xbf16>
    %cst = arith.constant dense<0.000000e+00> : vector<8x256xf32>
    %2 = tpu.matmul %0, %1, %cst {dimension_numbers = #tpu.dot_dimension_numbers<[1], [0], [0], [1], [0, 0, 1, 1], [], []>} : vector<8x256xbf16>, vector<256x256xbf16>, vector<8x256xf32> -> vector<8x256xf32>
    %c0_3 = arith.constant 0 : index
    %c0_4 = arith.constant 0 : index
    %3 = vector.load %arg3[%c0_3, %c0_4] : memref<1x256xf32, #tpu.memory_space<vmem>>, vector<1x256xf32>
    %4 = vector.broadcast %3 : vector<1x256xf32> to vector<8x256xf32>
    %5 = arith.addf %2, %4 : vector<8x256xf32>
    %6 = vector.extract_strided_slice %5 {offsets = [0, 0], sizes = [8, 128], strides = [1, 1]} : vector<8x256xf32> to vector<8x128xf32>
    %7 = vector.extract_strided_slice %5 {offsets = [0, 128], sizes = [8, 128], strides = [1, 1]} : vector<8x256xf32> to vector<8x128xf32>
    %cst_5 = arith.constant 5.000000e-01 : f32
    %8 = vector.broadcast %cst_5 : f32 to vector<8x128xf32>
    %9 = arith.mulf %7, %8 : vector<8x128xf32>
    %10 = math.exp %9 : vector<8x128xf32>
    %c0_6 = arith.constant 0 : index
    %c0_7 = arith.constant 0 : index
    %11 = vector.load %arg4[%c0_6, %c0_7] : memref<8x128xf32, #tpu.memory_space<vmem>>, vector<8x128xf32>
    %12 = arith.mulf %10, %11 : vector<8x128xf32>
    %13 = arith.addf %6, %12 : vector<8x128xf32>
    %c0_8 = arith.constant 0 : index
    %c0_9 = arith.constant 0 : index
    %14 = vector.load %arg5[%c0_8, %c0_9] : memref<8x384xf32, #tpu.memory_space<vmem>>, vector<8x128xf32>
    tpu.vector_store %arg5[%c0_8, %c0_9], %6 {strides = array<i32>} : memref<8x384xf32, #tpu.memory_space<vmem>>, vector<8x128xf32>,
    %c0_10 = arith.constant 0 : index
    %c128 = arith.constant 128 : index
    %15 = vector.load %arg5[%c0_10, %c128] : memref<8x384xf32, #tpu.memory_space<vmem>>, vector<8x128xf32>
    tpu.vector_store %arg5[%c0_10, %c128], %7 {strides = array<i32>} : memref<8x384xf32, #tpu.memory_space<vmem>>, vector<8x128xf32>,
    %c0_11 = arith.constant 0 : index
    %c256 = arith.constant 256 : index
    %16 = vector.load %arg5[%c0_11, %c256] : memref<8x384xf32, #tpu.memory_space<vmem>>, vector<8x128xf32>
    tpu.vector_store %arg5[%c0_11, %c256], %13 {strides = array<i32>} : memref<8x384xf32, #tpu.memory_space<vmem>>, vector<8x128xf32>,
    return
  }
  func.func @transform_0(%arg0: i32) -> (i32, i32) {
    %c0_i32 = arith.constant 0 : i32
    %c0_i32_0 = arith.constant 0 : i32
    return %arg0, %c0_i32 : i32, i32
  }
  func.func @transform_1(%arg0: i32) -> (i32, i32) {
    %c0_i32 = arith.constant 0 : i32
    %c0_i32_0 = arith.constant 0 : i32
    %c0_i32_1 = arith.constant 0 : i32
    return %c0_i32, %c0_i32_0 : i32, i32
  }
  func.func @transform_2(%arg0: i32) -> (i32, i32) {
    %c0_i32 = arith.constant 0 : i32
    %c0_i32_0 = arith.constant 0 : i32
    %c0_i32_1 = arith.constant 0 : i32
    return %c0_i32, %c0_i32_0 : i32, i32
  }
  func.func @transform_3(%arg0: i32) -> (i32, i32) {
    %c0_i32 = arith.constant 0 : i32
    %c0_i32_0 = arith.constant 0 : i32
    return %arg0, %c0_i32 : i32, i32
  }
  func.func @transform_4(%arg0: i32) -> (i32, i32) {
    %c0_i32 = arith.constant 0 : i32
    %c0_i32_0 = arith.constant 0 : i32
    return %arg0, %c0_i32 : i32, i32
  }
}

</mosaic_0001>

<llo_original>
// kernel: condition_agu.1
$region0: #{condition_agu.1}
  #allocation0 [shape = 'u32[]', space=smem, size = 0x4, offset = 0x4, fixed_abs, tag = 'smem constant byte address 0x4 - core index']
  #allocation1 [shape = 'u32[144,128]{1,0:T(1,128)}', space=vmem, size = 0x12000, scoped, tag = 'internal scratch']
  %s0 = inlined_call_operand.vmem [shape: bf16[8,256], index: 0, kind: input, shape index: {}]
  %s1 = inlined_call_operand.vmem [shape: bf16[256,256], index: 1, kind: input, shape index: {}]
  %s2 = inlined_call_operand.vmem [shape: f32[1,256], index: 2, kind: input, shape index: {}]
  %s3 = inlined_call_operand.vmem [shape: f32[8,128], index: 3, kind: input, shape index: {}]
  %s4 = inlined_call_operand.vmem [shape: f32[8,384], index: 4, kind: output, shape index: {}]
  %s5 = sld [smem:[#allocation0]]
  $region26: #{condition_agu.1} parent=0
    _
  %s7 = ssub.s32 1, %s5
  %s8 = scalar_select 0, %s7, %s5
  // Predicated region
  $region2: #{condition_agu.1} parent=0 // pred_check
    _
  $region3: #{condition_agu.1} parent=0 // pred_check_branch
    %10 = sbr.rel (0) target = $region5
  $region4: #{condition_agu.1} parent=0 // pred_region
    _
  $region5: #{condition_agu.1} parent=0 // pred_fallthru
    _
  // Predicated region
  $region6: #{condition_agu.1} parent=0 // pred_check
    _
  $region7: #{condition_agu.1} parent=0 // pred_check_branch
    %12 = sbr.rel (0) target = $region9
  $region8: #{condition_agu.1} parent=0 // pred_region
    _
  $region9: #{condition_agu.1} parent=0 // pred_fallthru
    _
  // Predicated region
  $region10: #{condition_agu.1} parent=0 // pred_check
    _
  $region11: #{condition_agu.1} parent=0 // pred_check_branch
    %14 = sbr.rel (0) target = $region13
  $region12: #{condition_agu.1} parent=0 // pred_region
    _
  $region13: #{condition_agu.1} parent=0 // pred_fallthru
    _
  // Predicated region
  $region14: #{condition_agu.1} parent=0 // pred_check
    _
  $region15: #{condition_agu.1} parent=0 // pred_check_branch
    %16 = sbr.rel (0) target = $region17
  $region16: #{condition_agu.1} parent=0 // pred_region
    _
  $region17: #{condition_agu.1} parent=0 // pred_fallthru
    _
  %v17 = vld [vmem:[%s0] sm:$0xff]
  %v18 = vld [vmem:[%s1] sm:$0xff]
  %v19 = vld [vmem:[%s1 + $0x8] sm:$0xff]
  %v20 = vld [vmem:[%s1 + $0x10] sm:$0xff]
  %v21 = vld [vmem:[%s1 + $0x18] sm:$0xff]
  %v22 = vld [vmem:[%s1 + $0x20] sm:$0xff]
  %v23 = vld [vmem:[%s1 + $0x28] sm:$0xff]
  %v24 = vld [vmem:[%s1 + $0x30] sm:$0xff]
  %v25 = vld [vmem:[%s1 + $0x38] sm:$0xff]
  %v26 = vld [vmem:[%s1 + $0x40] sm:$0xff]
  %v27 = vld [vmem:[%s1 + $0x48] sm:$0xff]
  %v28 = vld [vmem:[%s1 + $0x50] sm:$0xff]
  %v29 = vld [vmem:[%s1 + $0x58] sm:$0xff]
  %v30 = vld [vmem:[%s1 + $0x60] sm:$0xff]
  %v31 = vld [vmem:[%s1 + $0x68] sm:$0xff]
  %v32 = vld [vmem:[%s1 + $0x70] sm:$0xff]
  %v33 = vld [vmem:[%s1 + $0x78] sm:$0xff]
  %v34 = vld [vmem:[%s1 + $0x80] sm:$0xff]
  %v35 = vld [vmem:[%s1 + $0x88] sm:$0xff]
  %v36 = vld [vmem:[%s1 + $0x90] sm:$0xff]
  %v37 = vld [vmem:[%s1 + $0x98] sm:$0xff]
  %v38 = vld [vmem:[%s1 + $0xa0] sm:$0xff]
  %v39 = vld [vmem:[%s1 + $0xa8] sm:$0xff]
  %v40 = vld [vmem:[%s1 + $0xb0] sm:$0xff]
  %v41 = vld [vmem:[%s1 + $0xb8] sm:$0xff]
  %v42 = vld [vmem:[%s1 + $0xc0] sm:$0xff]
  %v43 = vld [vmem:[%s1 + $0xc8] sm:$0xff]
  %v44 = vld [vmem:[%s1 + $0xd0] sm:$0xff]
  %v45 = vld [vmem:[%s1 + $0xd8] sm:$0xff]
  %v46 = vld [vmem:[%s1 + $0xe0] sm:$0xff]
  %v47 = vld [vmem:[%s1 + $0xe8] sm:$0xff]
  %v48 = vld [vmem:[%s1 + $0xf0] sm:$0xff]
  %v49 = vld [vmem:[%s1 + $0xf8] sm:$0xff]
  %v50 = vld [vmem:[%s2] sm:$0x3]
  %v52 = vlaneseq
  %v53 = vshrl.u32 %v52, 7
  %v54 = vsub.s32 0, %v53
  %v55 = vrot.slane %v50, %v54
  %v56 = vlaneseq
  %v57 = vshrl.u32 %v56, 7
  %v58 = vsub.s32 1, %v57
  %v59 = vrot.slane %v50, %v58
  %v63 = vunpack.c.l.b16 %v17
  %v64 = vunpack.c.h.b16 %v17
  %v65 = vpack.c.b16 %v63, %v63
  %v66 = vpack.c.b16 %v64, %v64
  %v101 = vunpack.c.l.b16 %v18
  %v102 = vunpack.c.h.b16 %v18
  %v103 = vunpack.c.l.b16 %v19
  %v104 = vunpack.c.h.b16 %v19
  %v105 = vunpack.c.l.b16 %v20
  %v106 = vunpack.c.h.b16 %v20
  %v107 = vunpack.c.l.b16 %v21
  %v108 = vunpack.c.h.b16 %v21
  %v109 = vunpack.c.l.b16 %v22
  %v110 = vunpack.c.h.b16 %v22
  %v111 = vunpack.c.l.b16 %v23
  %v112 = vunpack.c.h.b16 %v23
  %v113 = vunpack.c.l.b16 %v24
  %v114 = vunpack.c.h.b16 %v24
  %v115 = vunpack.c.l.b16 %v25
  %v116 = vunpack.c.h.b16 %v25
  %v117 = vunpack.c.l.b16 %v26
  %v118 = vunpack.c.h.b16 %v26
  %v119 = vunpack.c.l.b16 %v27
  %v120 = vunpack.c.h.b16 %v27
  %v121 = vunpack.c.l.b16 %v28
  %v122 = vunpack.c.h.b16 %v28
  %v123 = vunpack.c.l.b16 %v29
  %v124 = vunpack.c.h.b16 %v29
  %v125 = vunpack.c.l.b16 %v30
  %v126 = vunpack.c.h.b16 %v30
  %v127 = vunpack.c.l.b16 %v31
  %v128 = vunpack.c.h.b16 %v31
  %v129 = vunpack.c.l.b16 %v32
  %v130 = vunpack.c.h.b16 %v32
  %v131 = vunpack.c.l.b16 %v33
  %v132 = vunpack.c.h.b16 %v33
  %v133 = vunpack.c.l.b16 %v34
  %v134 = vunpack.c.h.b16 %v34
  %v135 = vunpack.c.l.b16 %v35
  %v136 = vunpack.c.h.b16 %v35
  %v137 = vunpack.c.l.b16 %v36
  %v138 = vunpack.c.h.b16 %v36
  %v139 = vunpack.c.l.b16 %v37
  %v140 = vunpack.c.h.b16 %v37
  %v141 = vunpack.c.l.b16 %v38
  %v142 = vunpack.c.h.b16 %v38
  %v143 = vunpack.c.l.b16 %v39
  %v144 = vunpack.c.h.b16 %v39
  %v145 = vunpack.c.l.b16 %v40
  %v146 = vunpack.c.h.b16 %v40
  %v147 = vunpack.c.l.b16 %v41
  %v148 = vunpack.c.h.b16 %v41
  %v149 = vunpack.c.l.b16 %v42
  %v150 = vunpack.c.h.b16 %v42
  %v151 = vunpack.c.l.b16 %v43
  %v152 = vunpack.c.h.b16 %v43
  %v153 = vunpack.c.l.b16 %v44
  %v154 = vunpack.c.h.b16 %v44
  %v155 = vunpack.c.l.b16 %v45
  %v156 = vunpack.c.h.b16 %v45
  %v157 = vunpack.c.l.b16 %v46
  %v158 = vunpack.c.h.b16 %v46
  %v159 = vunpack.c.l.b16 %v47
  %v160 = vunpack.c.h.b16 %v47
  %v161 = vunpack.c.l.b16 %v48
  %v162 = vunpack.c.h.b16 %v48
  %v163 = vunpack.c.l.b16 %v49
  %v164 = vunpack.c.h.b16 %v49
  %v165 = vpack.c.b16 %v103, %v101
  %v166 = vpack.c.b16 %v104, %v102
  %v167 = vpack.c.b16 %v107, %v105
  %v168 = vpack.c.b16 %v108, %v106
  %v169 = vpack.c.b16 %v111, %v109
  %v170 = vpack.c.b16 %v112, %v110
  %v171 = vpack.c.b16 %v115, %v113
  %v172 = vpack.c.b16 %v116, %v114
  %v173 = vpack.c.b16 %v119, %v117
  %v174 = vpack.c.b16 %v120, %v118
  %v175 = vpack.c.b16 %v123, %v121
  %v176 = vpack.c.b16 %v124, %v122
  %v177 = vpack.c.b16 %v127, %v125
  %v178 = vpack.c.b16 %v128, %v126
  %v179 = vpack.c.b16 %v131, %v129
  %v180 = vpack.c.b16 %v132, %v130
  %v181 = vpack.c.b16 %v135, %v133
  %v182 = vpack.c.b16 %v136, %v134
  %v183 = vpack.c.b16 %v139, %v137
  %v184 = vpack.c.b16 %v140, %v138
  %v185 = vpack.c.b16 %v143, %v141
  %v186 = vpack.c.b16 %v144, %v142
  %v187 = vpack.c.b16 %v147, %v145
  %v188 = vpack.c.b16 %v148, %v146
  %v189 = vpack.c.b16 %v151, %v149
  %v190 = vpack.c.b16 %v152, %v150
  %v191 = vpack.c.b16 %v155, %v153
  %v192 = vpack.c.b16 %v156, %v154
  %v193 = vpack.c.b16 %v159, %v157
  %v194 = vpack.c.b16 %v160, %v158
  %v195 = vpack.c.b16 %v163, %v161
  %v196 = vpack.c.b16 %v164, %v162
  %229 = vmatprep.subr.bf16.mxu0 %v180
  %230 = vmatpush1.bf16.msra.mxu0 %v179
  %231 = vmatprep.subr.bf16.mxu0 %v178
  %232 = vmatpush1.bf16.msra.mxu0 %v177
  %233 = vmatprep.subr.bf16.mxu0 %v176
  %234 = vmatpush1.bf16.msra.mxu0 %v175
  %235 = vmatprep.subr.bf16.mxu0 %v174
  %236 = vmatpush1.bf16.msra.mxu0 %v173
  %237 = vmatprep.subr.bf16.mxu0 %v172
  %238 = vmatpush1.bf16.msra.mxu0 %v171
  %239 = vmatprep.subr.bf16.mxu0 %v170
  %240 = vmatpush1.bf16.msra.mxu0 %v169
  %241 = vmatprep.subr.bf16.mxu0 %v168
  %242 = vmatpush1.bf16.msra.mxu0 %v167
  %243 = vmatprep.subr.bf16.mxu0 %v166
  %244 = vmatpush1.bf16.msra.mxu0 %v165
  %245 = vmatprep.subr.bf16.mxu0 %v196
  %246 = vmatpush2.bf16.msra.mxu0 %v195
  %247 = vmatprep.subr.bf16.mxu0 %v194
  %248 = vmatpush2.bf16.msra.mxu0 %v193
  %249 = vmatprep.subr.bf16.mxu0 %v192
  %250 = vmatpush2.bf16.msra.mxu0 %v191
  %251 = vmatprep.subr.bf16.mxu0 %v190
  %252 = vmatpush2.bf16.msra.mxu0 %v189
  %253 = vmatprep.subr.bf16.mxu0 %v188
  %254 = vmatpush2.bf16.msra.mxu0 %v187
  %255 = vmatprep.subr.bf16.mxu0 %v186
  %256 = vmatpush2.bf16.msra.mxu0 %v185
  %257 = vmatprep.subr.bf16.mxu0 %v184
  %258 = vmatpush2.bf16.msra.mxu0 %v183
  %259 = vmatprep.subr.bf16.mxu0 %v182
  %260 = vmatpush2.bf16.msra.mxu0 %v181
  %261 = vmatprep.mubr.bf16.mxu0 %v66
  %262 = vmatmul.mubr.bf16.gmra.mxu0 %v65
  %v263 = vpop.f32.mrf.mxu0
  %v264 = vadd.f32 %v55, %v263
  %v265 = vpop.f32.mrf.mxu0
  %v266 = vadd.f32 %v59, %v265
  %v267 = vpop.f32.mrf.mxu0
  %v268 = vpop.f32.mrf.mxu0
  %269 = vdwg.mxu0
  %v270 = vmul.f32 %v266, 0.5
  %v271 = vmul.f32 %v270, 1.442695
  %v272 = vpow.pop %v271
  %v273 = vld [vmem:[%s3] sm:$0xff]
  %v274 = vmul.f32 %v272, %v273
  %v275 = vadd.f32 %v264, %v274
  %276 = vst [vmem:[%s4] sm:$0xff] %v264
  %277 = vst [vmem:[%s4 + $0x8] sm:$0xff] %v266
  %278 = vst [vmem:[%s4 + $0x10] sm:$0xff] %v275
  // Predicated region
  $region18: #{condition_agu.1} parent=0 // pred_check
    _
  $region19: #{condition_agu.1} parent=0 // pred_check_branch
    %280 = sbr.rel (0) target = $region21
  $region20: #{condition_agu.1} parent=0 // pred_region
    _
  $region21: #{condition_agu.1} parent=0 // pred_fallthru
    _
  // Predicated region
  $region22: #{condition_agu.1} parent=0 // pred_check
    _
  $region23: #{condition_agu.1} parent=0 // pred_check_branch
    %282 = sbr.rel (0) target = $region25
  $region24: #{condition_agu.1} parent=0 // pred_region
    _
  $region25: #{condition_agu.1} parent=0 // pred_fallthru
    _

</llo_original>
